<compile_context>
chip_gen: v5e
topology: v5e:2x2
jax: 0.10.0
libtpu: 0.0.40
codegen_flags: <defaults>
</compile_context>

<pallas_src>
import functools

import jax
import jax.numpy as jnp
from jax.experimental import pallas as pl
from jax.experimental.pallas import tpu as pltpu


# ---------------------------------------------------------------------------
# Fused LayerNorm (over C,H,W per sample, per-channel affine) + ReLU kernel.
# ---------------------------------------------------------------------------
def _ln_relu_kernel(x_ref, w_ref, b_ref, o_ref,
                    sum_ref, ssq_ref, scale_ref, shift_ref,
                    *, eps, inv_n, hw, tile, need_mask):
    phase = pl.program_id(1)   # 0 = stats sweep, 1 = normalize sweep
    t = pl.program_id(2)

    @pl.when(jnp.logical_and(phase == 0, t == 0))
    def _init():
        sum_ref[...] = jnp.zeros_like(sum_ref)
        ssq_ref[...] = jnp.zeros_like(ssq_ref)

    @pl.when(phase == 0)
    def _stats():
        x = x_ref[...].astype(jnp.float32)                       # (1, C, tile)

        def _accumulate(xv):
            # Per-channel partial sums: the cross-vreg accumulation stays on
            # the VPU; only a tiny (1,C,1) combine happens once in phase 1.
            sum_ref[...] += jnp.sum(xv, axis=2, keepdims=True)
            ssq_ref[...] += jnp.sum(xv * xv, axis=2, keepdims=True)

        if need_mask:
            # Only the last tile of a sample overhangs H*W; its out-of-bounds
            # lanes hold uninitialized VMEM and must not enter the statistics.
            is_edge = t == pl.num_programs(2) - 1

            @pl.when(is_edge)
            def _edge():
                pos = t * tile + jax.lax.broadcasted_iota(jnp.int32, x.shape, 2)
                _accumulate(jnp.where(pos < hw, x, 0.0))

            @pl.when(jnp.logical_not(is_edge))
            def _full():
                _accumulate(x)
        else:
            _accumulate(x)

    @pl.when(phase == 1)
    def _normalize():
        @pl.when(t == 0)
        def _finalize_stats():
            total = jnp.sum(sum_ref[...])
            total_sq = jnp.sum(ssq_ref[...])
            mean = total * inv_n
            var = jnp.maximum(total_sq * inv_n - mean * mean, 0.0)
            inv_std = jax.lax.rsqrt(var + eps)
            w = w_ref[...].astype(jnp.float32)                   # (1, C, 1)
            b = b_ref[...].astype(jnp.float32)                   # (1, C, 1)
            scale = w * inv_std
            scale_ref[...] = scale
            shift_ref[...] = b - mean * scale

        x = x_ref[...].astype(jnp.float32)                       # (1, C, tile)
        y = x * scale_ref[...] + shift_ref[...]                  # one FMA / elem
        # Lanes past H*W in the last tile compute garbage but Pallas edge-masks
        # the store, so nothing out of bounds reaches HBM.
        o_ref[...] = jnp.maximum(y, 0.0).astype(o_ref.dtype)     # fused ReLU


def _vmem_params():
    """(target_tile_bytes, vmem_limit_bytes) tuned per TPU generation."""
    kind = ""
    try:
        kind = jax.devices()[0].device_kind.lower()
    except Exception:
        pass
    # Physical VMEM per TensorCore: 128 MiB on v5e/v6e, 64 MiB on v7x.
    vmem_cap = (64 << 20) if "7" in kind else (128 << 20)
    try:
        vmem_cap = int(pltpu.get_tpu_info().vmem_capacity_bytes)
    except Exception:
        pass
    is_v5e = ("v5 lite" in kind) or ("v5e" in kind) or ("v5litepod" in kind)
    # v5e: slower HBM -> per-step overhead less dominant, smaller tiles suffice.
    target_tile_bytes = (4 << 20) if is_v5e else (8 << 20)
    # ~4 live tile buffers (double-buffered input + output) + small scratch.
    # Keep >=16 MiB headroom under physical VMEM (matters on v7x's 64 MiB/TC).
    budget = max(16 << 20, min(vmem_cap - (16 << 20), 48 << 20))
    target_tile_bytes = min(target_tile_bytes, budget // 4)
    return int(target_tile_bytes), int(budget)


def _pick_hw_tile(C, HW, itemsize, target_bytes):
    """Lane-dense HW tile (multiple of 128), capped at ~target_bytes/block."""
    LANE = 128
    hw_lanes = int(pl.cdiv(HW, LANE)) * LANE
    max_lanes = (target_bytes // max(1, C * itemsize)) // LANE * LANE
    max_lanes = max(LANE, int(max_lanes))
    return int(min(hw_lanes, max_lanes))


def layernorm_relu(x, weight, bias, eps=1e-5):
    """Fused LayerNorm_DRIT (normalize over (C,H,W), per-channel affine) + ReLU.

    x: (N, C, H, W); weight, bias: (C,)  (PyTorch params are (C,1,1)).
    """
    N, C, H, W = x.shape
    HW = H * W
    target_tile_bytes, vmem_limit = _vmem_params()
    tile = _pick_hw_tile(C, HW, jnp.dtype(x.dtype).itemsize, target_tile_bytes)
    num_tiles = int(pl.cdiv(HW, tile))
    need_mask = (HW % tile) != 0

    # Trivial (contiguous) reshape, no HBM traffic.  No padding: the ragged
    # tail is masked in-kernel and the edge store is masked by Pallas.
    x2 = x.reshape(N, C, HW)
    w3 = weight.reshape(1, C, 1).astype(jnp.float32)
    b3 = bias.reshape(1, C, 1).astype(jnp.float32)

    kernel = functools.partial(
        _ln_relu_kernel, eps=float(eps), inv_n=1.0 / float(C * HW),
        hw=HW, tile=tile, need_mask=need_mask)

    # TODO(synk): if downstream tolerates bf16, emit the conv output / this
    # out_shape in bf16 for a near-2x epilogue speedup (math stays f32 inside).
    out = pl.pallas_call(
        kernel,
        out_shape=jax.ShapeDtypeStruct((N, C, HW), x.dtype),
        grid_spec=pltpu.PrefetchScalarGridSpec(
            num_scalar_prefetch=0,
            grid=(N, 2, num_tiles),   # samples x {stats, normalize} x HW tiles
            in_specs=[
                # x index does not depend on the phase: with num_tiles == 1 the
                # block stays resident across both phases (single HBM read).
                pl.BlockSpec((1, C, tile), lambda n, p, t: (n, 0, t)),
                pl.BlockSpec((1, C, 1), lambda n, p, t: (0, 0, 0)),
                pl.BlockSpec((1, C, 1), lambda n, p, t: (0, 0, 0)),
            ],
            # FRAGILE BY DESIGN: during the stats sweep (p==0) the output block
            # index stays pinned at tile 0 and the kernel never writes it, so
            # nothing is flushed to HBM until the normalize sweep (p==1)
            # overwrites each tile in order.  Changing this index_map (e.g.
            # dropping the p*t trick) would flush uninitialized VMEM to HBM.
            out_specs=pl.BlockSpec((1, C, tile), lambda n, p, t: (n, 0, p * t)),
            scratch_shapes=[
                pltpu.VMEM((1, C, 1), jnp.float32),   # per-channel sum
                pltpu.VMEM((1, C, 1), jnp.float32),   # per-channel sum of squares
                pltpu.VMEM((1, C, 1), jnp.float32),   # folded scale = w * inv_std
                pltpu.VMEM((1, C, 1), jnp.float32),   # folded shift = b - mean*scale
            ],
        ),
        compiler_params=pltpu.CompilerParams(
            dimension_semantics=("parallel", "arbitrary", "arbitrary"),
            vmem_limit_bytes=vmem_limit,
        ),
    )(x2, w3, b3)

    return out.reshape(N, C, H, W)


# ---------------------------------------------------------------------------
# ConvTranspose2d (PyTorch semantics: NCHW input, weight (C_in, C_out, kH, kW)).
# ---------------------------------------------------------------------------
def conv_transpose2d(x, w, b, stride, padding, output_padding):
    # TODO(synk): the transposed convolution itself is left to XLA's MXU conv
    # (lax.conv_general_dilated with input dilation), not a Pallas kernel.  At
    # production DRIT sizes a sub-pixel (space-to-depth) decomposition and/or
    # NHWC layout would avoid the ~75% zero MACs that lhs_dilation inserts at
    # stride 2 (biggest win on v5e's smaller MXU).
    kH, kW = w.shape[2], w.shape[3]
    w_t = jnp.transpose(jnp.flip(w, axis=(2, 3)), (1, 0, 2, 3))  # (C_out, C_in, kH, kW)
    pad_h = (kH - 1 - padding, kH - 1 - padding + output_padding)
    pad_w = (kW - 1 - padding, kW - 1 - padding + output_padding)
    y = jax.lax.conv_general_dilated(
        x, w_t,
        window_strides=(1, 1),
        padding=(pad_h, pad_w),
        lhs_dilation=(stride, stride),
        rhs_dilation=(1, 1),
        dimension_numbers=("NCHW", "OIHW", "NCHW"))
    return y + b.reshape(1, -1, 1, 1)


def relu_ins_conv_transpose2d(x, conv_w, conv_b, ln_w, ln_b, *,
                              stride, padding, output_padding, eps=1e-5):
    """Forward of ReLUINSConvTranspose2d: ConvTranspose2d -> LayerNorm -> ReLU."""
    y = conv_transpose2d(x, conv_w, conv_b, stride, padding, output_padding)
    return layernorm_relu(y, ln_w, ln_b, eps=eps)


# ---------------------------------------------------------------------------
# Pure-JAX reference (mirrors F.layer_norm over dims (1,2,3) + ReLU).
# ---------------------------------------------------------------------------
def forward_ref(x, conv_w, conv_b, ln_w, ln_b, *,
                stride, padding, output_padding, eps=1e-5):
    y = conv_transpose2d(x, conv_w, conv_b, stride, padding, output_padding)
    yf = y.astype(jnp.float32)
    mean = jnp.mean(yf, axis=(1, 2, 3), keepdims=True)
    var = jnp.mean((yf - mean) ** 2, axis=(1, 2, 3), keepdims=True)
    xhat = (yf - mean) / jnp.sqrt(var + eps)
    out = xhat * ln_w.reshape(1, -1, 1, 1) + ln_b.reshape(1, -1, 1, 1)
    return jnp.maximum(out, 0.0).astype(y.dtype)


if __name__ == "__main__":
    def run_case(seed, N, C_in, C_out, H, W, k, s, p, op):
        key = jax.random.PRNGKey(seed)
        kx, kw, kb = jax.random.split(key, 3)
        x = jax.random.normal(kx, (N, C_in, H, W), dtype=jnp.float32)
        # gaussian_weights_init: Conv* weights ~ N(0, 0.02); conv bias small.
        conv_w = 0.02 * jax.random.normal(kw, (C_in, C_out, k, k), dtype=jnp.float32)
        conv_b = 0.01 * jax.random.normal(kb, (C_out,), dtype=jnp.float32)
        # LayerNorm_DRIT affine params per __init__: weight = ones, bias = zeros.
        ln_w = jnp.ones((C_out,), dtype=jnp.float32)
        ln_b = jnp.zeros((C_out,), dtype=jnp.float32)

        out = relu_ins_conv_transpose2d(
            x, conv_w, conv_b, ln_w, ln_b,
            stride=s, padding=p, output_padding=op)
        out = jax.block_until_ready(out)

        ref = forward_ref(
            x, conv_w, conv_b, ln_w, ln_b,
            stride=s, padding=p, output_padding=op)

        H_out = (H - 1) * s - 2 * p + k + op
        W_out = (W - 1) * s - 2 * p + k + op
        assert out.shape == (N, C_out, H_out, W_out), out.shape
        err = float(jnp.max(jnp.abs(out - ref)))
        assert jnp.allclose(out, ref, atol=1e-4, rtol=1e-4), err

    # Spec-consistent small case: conv output is (2, 8, 32, 32), HW = 1024
    # (lane-aligned, single resident tile per sample).
    run_case(0, N=2, C_in=4, C_out=8, H=16, W=16, k=3, s=2, p=1, op=1)
    # Ragged case: conv output is (1, 6, 18, 18), HW = 324 (not a multiple of
    # 128) -> exercises the in-kernel tail masking + masked edge store path.
    run_case(0, N=1, C_in=3, C_out=6, H=9, W=9, k=4, s=2, p=1, op=0)

    print("KERNEL_OK")
</pallas_src>

<mosaic_0001>
module attributes {stable_mosaic.version = 11 : i64} {
  func.func @_ln_relu_kernel(%arg0: i32, %arg1: i32, %arg2: i32, %arg3: memref<1x8x1024xf32, #tpu.memory_space<vmem>>, %arg4: memref<1x8x1xf32, #tpu.memory_space<vmem>>, %arg5: memref<1x8x1xf32, #tpu.memory_space<vmem>>, %arg6: memref<1x8x1024xf32, #tpu.memory_space<vmem>>, %arg7: memref<1x8x1xf32, #tpu.memory_space<vmem>>, %arg8: memref<1x8x1xf32, #tpu.memory_space<vmem>>, %arg9: memref<1x8x1xf32, #tpu.memory_space<vmem>>, %arg10: memref<1x8x1xf32, #tpu.memory_space<vmem>>) attributes {dimension_semantics = [#tpu.dimension_semantics<parallel>, #tpu.dimension_semantics<arbitrary>, #tpu.dimension_semantics<arbitrary>], iteration_bounds = array<i64: 2, 2, 1>, scalar_prefetch = 0 : i64, scratch_operands = 4 : i64, tpu.core_type = #tpu.core_type<tc>, window_params = [{transform_indices = @transform_0, window_bounds = array<i64: 1, 8, 1024>}, {pipeline_mode = #tpu.pipeline_mode<synchronous>, transform_indices = @transform_1, window_bounds = array<i64: 1, 8, 1>}, {pipeline_mode = #tpu.pipeline_mode<synchronous>, transform_indices = @transform_2, window_bounds = array<i64: 1, 8, 1>}, {transform_indices = @transform_3, window_bounds = array<i64: 1, 8, 1024>}]} {
    %c0_i32 = arith.constant 0 : i32
    %0 = arith.cmpi eq, %arg1, %c0_i32 : i32
    %c0_i32_0 = arith.constant 0 : i32
    %1 = arith.cmpi eq, %arg2, %c0_i32_0 : i32
    %2 = arith.andi %0, %1 : i1
    %3 = arith.extui %2 : i1 to i32
    %c0_i32_1 = arith.constant 0 : i32
    %4 = arith.cmpi ne, %3, %c0_i32_1 : i32
    scf.if %4 {
      %cst = arith.constant 0.000000e+00 : f32
      %11 = vector.broadcast %cst : f32 to vector<1x8x1xf32>
      %c0 = arith.constant 0 : index
      %c0_5 = arith.constant 0 : index
      %c0_6 = arith.constant 0 : index
      %12 = vector.load %arg7[%c0, %c0_5, %c0_6] : memref<1x8x1xf32, #tpu.memory_space<vmem>>, vector<1x8x1xf32>
      tpu.vector_store %arg7[%c0, %c0_5, %c0_6], %11 {strides = array<i32>} : memref<1x8x1xf32, #tpu.memory_space<vmem>>, vector<1x8x1xf32>,
      %cst_7 = arith.constant 0.000000e+00 : f32
      %13 = vector.broadcast %cst_7 : f32 to vector<1x8x1xf32>
      %c0_8 = arith.constant 0 : index
      %c0_9 = arith.constant 0 : index
      %c0_10 = arith.constant 0 : index
      %14 = vector.load %arg8[%c0_8, %c0_9, %c0_10] : memref<1x8x1xf32, #tpu.memory_space<vmem>>, vector<1x8x1xf32>
      tpu.vector_store %arg8[%c0_8, %c0_9, %c0_10], %13 {strides = array<i32>} : memref<1x8x1xf32, #tpu.memory_space<vmem>>, vector<1x8x1xf32>,
    } else {
    }
    %c0_i32_2 = arith.constant 0 : i32
    %5 = arith.cmpi eq, %arg1, %c0_i32_2 : i32
    %6 = arith.extui %5 : i1 to i32
    %c0_i32_3 = arith.constant 0 : i32
    %7 = arith.cmpi ne, %6, %c0_i32_3 : i32
    scf.if %7 {
      %c0 = arith.constant 0 : index
      %c0_5 = arith.constant 0 : index
      %c0_6 = arith.constant 0 : index
      %11 = vector.load %arg3[%c0, %c0_5, %c0_6] : memref<1x8x1024xf32, #tpu.memory_space<vmem>>, vector<1x8x1024xf32>
      %c0_7 = arith.constant 0 : index
      %c0_8 = arith.constant 0 : index
      %c0_9 = arith.constant 0 : index
      %12 = vector.load %arg7[%c0_7, %c0_8, %c0_9] : memref<1x8x1xf32, #tpu.memory_space<vmem>>, vector<1x8x1xf32>
      %cst = arith.constant dense<0.000000e+00> : vector<1x8xf32>
      %13 = vector.multi_reduction <add>, %11, %cst [2] : vector<1x8x1024xf32> to vector<1x8xf32>
      %14 = vector.shape_cast %13 : vector<1x8xf32> to vector<1x8x1xf32>
      %15 = arith.addf %12, %14 : vector<1x8x1xf32>
      %c0_10 = arith.constant 0 : index
      %c0_11 = arith.constant 0 : index
      %c0_12 = arith.constant 0 : index
      %16 = vector.load %arg7[%c0_10, %c0_11, %c0_12] : memref<1x8x1xf32, #tpu.memory_space<vmem>>, vector<1x8x1xf32>
      tpu.vector_store %arg7[%c0_10, %c0_11, %c0_12], %15 {strides = array<i32>} : memref<1x8x1xf32, #tpu.memory_space<vmem>>, vector<1x8x1xf32>,
      %c0_13 = arith.constant 0 : index
      %c0_14 = arith.constant 0 : index
      %c0_15 = arith.constant 0 : index
      %17 = vector.load %arg8[%c0_13, %c0_14, %c0_15] : memref<1x8x1xf32, #tpu.memory_space<vmem>>, vector<1x8x1xf32>
      %18 = arith.mulf %11, %11 : vector<1x8x1024xf32>
      %cst_16 = arith.constant dense<0.000000e+00> : vector<1x8xf32>
      %19 = vector.multi_reduction <add>, %18, %cst_16 [2] : vector<1x8x1024xf32> to vector<1x8xf32>
      %20 = vector.shape_cast %19 : vector<1x8xf32> to vector<1x8x1xf32>
      %21 = arith.addf %17, %20 : vector<1x8x1xf32>
      %c0_17 = arith.constant 0 : index
      %c0_18 = arith.constant 0 : index
      %c0_19 = arith.constant 0 : index
      %22 = vector.load %arg8[%c0_17, %c0_18, %c0_19] : memref<1x8x1xf32, #tpu.memory_space<vmem>>, vector<1x8x1xf32>
      tpu.vector_store %arg8[%c0_17, %c0_18, %c0_19], %21 {strides = array<i32>} : memref<1x8x1xf32, #tpu.memory_space<vmem>>, vector<1x8x1xf32>,
    } else {
    }
    %c1_i32 = arith.constant 1 : i32
    %8 = arith.cmpi eq, %arg1, %c1_i32 : i32
    %9 = arith.extui %8 : i1 to i32
    %c0_i32_4 = arith.constant 0 : i32
    %10 = arith.cmpi ne, %9, %c0_i32_4 : i32
    scf.if %10 {
      %c0_i32_5 = arith.constant 0 : i32
      %11 = arith.cmpi eq, %arg2, %c0_i32_5 : i32
      %12 = arith.extui %11 : i1 to i32
      %c0_i32_6 = arith.constant 0 : i32
      %13 = arith.cmpi ne, %12, %c0_i32_6 : i32
      scf.if %13 {
        %c0_18 = arith.constant 0 : index
        %c0_19 = arith.constant 0 : index
        %c0_20 = arith.constant 0 : index
        %24 = vector.load %arg7[%c0_18, %c0_19, %c0_20] : memref<1x8x1xf32, #tpu.memory_space<vmem>>, vector<1x8x1xf32>
        %25 = vector.shape_cast %24 : vector<1x8x1xf32> to vector<1x1x8x1xf32>
        %cst_21 = arith.constant dense<0.000000e+00> : vector<1xf32>
        %26 = vector.multi_reduction <add>, %25, %cst_21 [1, 2, 3] : vector<1x1x8x1xf32> to vector<1xf32>
        %27 = vector.shape_cast %26 : vector<1xf32> to vector<1x1x1x1xf32>
        %28 = vector.extract %27[0, 0, 0, 0] : f32 from vector<1x1x1x1xf32>
        %c0_22 = arith.constant 0 : index
        %c0_23 = arith.constant 0 : index
        %c0_24 = arith.constant 0 : index
        %29 = vector.load %arg8[%c0_22, %c0_23, %c0_24] : memref<1x8x1xf32, #tpu.memory_space<vmem>>, vector<1x8x1xf32>
        %30 = vector.shape_cast %29 : vector<1x8x1xf32> to vector<1x1x8x1xf32>
        %cst_25 = arith.constant dense<0.000000e+00> : vector<1xf32>
        %31 = vector.multi_reduction <add>, %30, %cst_25 [1, 2, 3] : vector<1x1x8x1xf32> to vector<1xf32>
        %32 = vector.shape_cast %31 : vector<1xf32> to vector<1x1x1x1xf32>
        %33 = vector.extract %32[0, 0, 0, 0] : f32 from vector<1x1x1x1xf32>
        %cst_26 = arith.constant 1.22070313E-4 : f32
        %34 = arith.mulf %28, %cst_26 : f32
        %cst_27 = arith.constant 1.22070313E-4 : f32
        %35 = arith.mulf %33, %cst_27 : f32
        %36 = arith.mulf %34, %34 : f32
        %37 = arith.subf %35, %36 : f32
        %cst_28 = arith.constant 0.000000e+00 : f32
        %38 = arith.maximumf %37, %cst_28 : f32
        %cst_29 = arith.constant 9.99999974E-6 : f32
        %39 = arith.addf %38, %cst_29 : f32
        %40 = math.rsqrt %39 : f32
        %c0_30 = arith.constant 0 : index
        %c0_31 = arith.constant 0 : index
        %c0_32 = arith.constant 0 : index
        %41 = vector.load %arg4[%c0_30, %c0_31, %c0_32] : memref<1x8x1xf32, #tpu.memory_space<vmem>>, vector<1x8x1xf32>
        %c0_33 = arith.constant 0 : index
        %c0_34 = arith.constant 0 : index
        %c0_35 = arith.constant 0 : index
        %42 = vector.load %arg5[%c0_33, %c0_34, %c0_35] : memref<1x8x1xf32, #tpu.memory_space<vmem>>, vector<1x8x1xf32>
        %43 = vector.broadcast %40 : f32 to vector<1x8x1xf32>
        %44 = arith.mulf %41, %43 : vector<1x8x1xf32>
        %c0_36 = arith.constant 0 : index
        %c0_37 = arith.constant 0 : index
        %c0_38 = arith.constant 0 : index
        %45 = vector.load %arg9[%c0_36, %c0_37, %c0_38] : memref<1x8x1xf32, #tpu.memory_space<vmem>>, vector<1x8x1xf32>
        tpu.vector_store %arg9[%c0_36, %c0_37, %c0_38], %44 {strides = array<i32>} : memref<1x8x1xf32, #tpu.memory_space<vmem>>, vector<1x8x1xf32>,
        %46 = vector.broadcast %34 : f32 to vector<1x8x1xf32>
        %47 = arith.mulf %46, %44 : vector<1x8x1xf32>
        %48 = arith.subf %42, %47 : vector<1x8x1xf32>
        %c0_39 = arith.constant 0 : index
        %c0_40 = arith.constant 0 : index
        %c0_41 = arith.constant 0 : index
        %49 = vector.load %arg10[%c0_39, %c0_40, %c0_41] : memref<1x8x1xf32, #tpu.memory_space<vmem>>, vector<1x8x1xf32>
        tpu.vector_store %arg10[%c0_39, %c0_40, %c0_41], %48 {strides = array<i32>} : memref<1x8x1xf32, #tpu.memory_space<vmem>>, vector<1x8x1xf32>,
      } else {
      }
      %c0 = arith.constant 0 : index
      %c0_7 = arith.constant 0 : index
      %c0_8 = arith.constant 0 : index
      %14 = vector.load %arg3[%c0, %c0_7, %c0_8] : memref<1x8x1024xf32, #tpu.memory_space<vmem>>, vector<1x8x1024xf32>
      %c0_9 = arith.constant 0 : index
      %c0_10 = arith.constant 0 : index
      %c0_11 = arith.constant 0 : index
      %15 = vector.load %arg9[%c0_9, %c0_10, %c0_11] : memref<1x8x1xf32, #tpu.memory_space<vmem>>, vector<1x8x1xf32>
      %16 = vector.broadcast %15 : vector<1x8x1xf32> to vector<1x8x1024xf32>
      %17 = arith.mulf %14, %16 : vector<1x8x1024xf32>
      %c0_12 = arith.constant 0 : index
      %c0_13 = arith.constant 0 : index
      %c0_14 = arith.constant 0 : index
      %18 = vector.load %arg10[%c0_12, %c0_13, %c0_14] : memref<1x8x1xf32, #tpu.memory_space<vmem>>, vector<1x8x1xf32>
      %19 = vector.broadcast %18 : vector<1x8x1xf32> to vector<1x8x1024xf32>
      %20 = arith.addf %17, %19 : vector<1x8x1024xf32>
      %cst = arith.constant 0.000000e+00 : f32
      %21 = vector.broadcast %cst : f32 to vector<1x8x1024xf32>
      %22 = arith.maximumf %20, %21 : vector<1x8x1024xf32>
      %c0_15 = arith.constant 0 : index
      %c0_16 = arith.constant 0 : index
      %c0_17 = arith.constant 0 : index
      %23 = vector.load %arg6[%c0_15, %c0_16, %c0_17] : memref<1x8x1024xf32, #tpu.memory_space<vmem>>, vector<1x8x1024xf32>
      tpu.vector_store %arg6[%c0_15, %c0_16, %c0_17], %22 {strides = array<i32>} : memref<1x8x1024xf32, #tpu.memory_space<vmem>>, vector<1x8x1024xf32>,
    } else {
    }
    return
  }
  func.func @transform_0(%arg0: i32, %arg1: i32, %arg2: i32) -> (i32, i32, i32) {
    %c0_i32 = arith.constant 0 : i32
    %c0_i32_0 = arith.constant 0 : i32
    return %arg0, %c0_i32, %arg2 : i32, i32, i32
  }
  func.func @transform_1(%arg0: i32, %arg1: i32, %arg2: i32) -> (i32, i32, i32) {
    %c0_i32 = arith.constant 0 : i32
    %c0_i32_0 = arith.constant 0 : i32
    %c0_i32_1 = arith.constant 0 : i32
    %c0_i32_2 = arith.constant 0 : i32
    return %c0_i32, %c0_i32_0, %c0_i32_1 : i32, i32, i32
  }
  func.func @transform_2(%arg0: i32, %arg1: i32, %arg2: i32) -> (i32, i32, i32) {
    %c0_i32 = arith.constant 0 : i32
    %c0_i32_0 = arith.constant 0 : i32
    %c0_i32_1 = arith.constant 0 : i32
    %c0_i32_2 = arith.constant 0 : i32
    return %c0_i32, %c0_i32_0, %c0_i32_1 : i32, i32, i32
  }
  func.func @transform_3(%arg0: i32, %arg1: i32, %arg2: i32) -> (i32, i32, i32) {
    %0 = arith.muli %arg1, %arg2 : i32
    %c0_i32 = arith.constant 0 : i32
    %c0_i32_0 = arith.constant 0 : i32
    return %arg0, %c0_i32, %0 : i32, i32, i32
  }
}

</mosaic_0001>

<llo_original>
// kernel: tpu_custom_call.1
$region0: #{tpu_custom_call.1}
  #allocation0 [shape = 'u32[]', space=smem, size = 0x4, offset = 0x4, fixed_abs, tag = 'smem constant byte address 0x4 - core index']
  #allocation1 [shape = 'u32[72,128]{1,0:T(1,128)}', space=vmem, size = 0x9000, scoped, tag = 'internal scratch']
  #allocation2 [shape = 'f32[1,8,1]{2,1,0:T(8,128)}', space=vmem, size = 0x1000, scoped, tag = 'scratch operand']
  #allocation3 [shape = 'f32[1,8,1]{2,1,0:T(8,128)}', space=vmem, size = 0x1000, scoped, tag = 'scratch operand']
  #allocation4 [shape = 'f32[1,8,1]{2,1,0:T(8,128)}', space=vmem, size = 0x1000, scoped, tag = 'scratch operand']
  #allocation5 [shape = 'f32[1,8,1]{2,1,0:T(8,128)}', space=vmem, size = 0x1000, scoped, tag = 'scratch operand']
  %s0 = inlined_call_operand.hbm [shape: f32[2,8,1024], index: 0, kind: input, shape index: {}]
  %s1 = inlined_call_operand.vmem [shape: f32[1,8,1], index: 1, kind: input, shape index: {}]
  %s2 = inlined_call_operand.vmem [shape: f32[1,8,1], index: 2, kind: input, shape index: {}]
  %s3 = inlined_call_operand.hbm [shape: f32[2,8,1024], index: 3, kind: output, shape index: {}]
  %s4 = sld [smem:[#allocation0]]
  $region65: #{tpu_custom_call.1} parent=0
    _
  %s6 = ssub.s32 1, %s4
  %s7 = scalar_select 0, %s6, %s4
  $region1: #{tpu_custom_call.1} parent=0
    #allocation6 [shape = 'u8[65536]{0}', space=vmem, size = 0x10000, scoped, tag = 'input window, operand 0']
    #allocation7 [shape = 's32[2]{0}', space=sflag, size = 0x8, scoped, tag = 'scoped memory for tpu_custom_call.1']
    #allocation8 [shape = 's32[2]{0}', space=sflag, size = 0x8, scoped, tag = 'scoped memory for tpu_custom_call.1']
    #allocation9 [shape = 'u8[65536]{0}', space=vmem, size = 0x10000, scoped, tag = 'output window, operand 0']
    %8 = vsyncpa [#allocation7], 0
    %s9 = scalar_lea.sflag [#allocation7], 1
    %10 = vsyncpa %s9, 0
    %11 = vsyncpa [#allocation8], 0
    %s12 = scalar_lea.sflag [#allocation8], 1
    %13 = vsyncpa %s12, 0
    loop: start=0, step=1, limit=6
    $region2: #{tpu_custom_call.1} parent=1 // loop_pre_header
      _
    $region3: #{tpu_custom_call.1} parent=1 // loop_header
      %s15 = sphi 0, %s19
      %p16 = scmp.ge.s32.totalorder %s15, 6
      %s22 = sphi 0, %s41
      %s23 = sphi 0, %s37
      %s24 = sphi 0, %s33
      %s25 = sphi 0, %s22
      %s26 = sphi 0, %s23
      %s27 = sphi 0, %s24
      %s28 = sphi 0, %s25
      %s29 = sphi 0, %s26
      %s30 = sphi 0, %s27
      %s46 = sphi 0, %s48
      %s49 = sphi 0, %s46
      %s50 = sphi 0, %s49
      %s66 = sphi 0, %s50
      %s70 = sphi 0, %s70
      %s72 = sphi 0, %s70
      %s73 = sphi 0, %s72
      %s87 = sphi 0, %s73
      %s91 = sphi 0, %s91
      %s93 = sphi 0, %s91
      %s94 = sphi 0, %s93
      %s108 = sphi 0, %s94
      %s118 = sphi 0, %s120
      %s121 = sphi 0, %s118
      %s122 = sphi 0, %s121
      %s138 = sphi 0, %s122
    $region4: #{tpu_custom_call.1} parent=1 // loop_header_branch
      %18 = sbr.rel (%p16) target = $region8
    $region5: #{tpu_custom_call.1} parent=1 // loop_body
      %s20 = ssub.s32 %s15, 1
      %s21 = ssub.s32 %s15, 2
      %s31 = sadd.s32 1, %s24
      %p32 = scmp.ge.s32.totalorder %s31, 1
      %s33 = scalar_select %p32, 0, %s31
      %s34 = sadd.s32 1, %s23
      %s35 = scalar_select %p32, %s34, %s23
      %p36 = scmp.ge.s32.totalorder %s35, 2
      %s37 = scalar_select %p36, 0, %s35
      %s38 = sadd.s32 1, %s22
      %s39 = scalar_select %p36, %s38, %s22
      %p40 = scmp.ge.s32.totalorder %s39, 2
      %s41 = scalar_select %p40, 0, %s39
      %s42 = ssub.s32 %s22, %s41
      %s43 = ssub.s32 %s24, %s33
      %s44 = sor.u32 %s42, %s43
      %p45 = scmp.eq.s32.totalorder %s44, 0
      %s47 = sadd.s32 %s46, 1
      %s48 = scalar_select %p45, %s46, %s47
      %p51 = pneg %p45
      %p52 = scmp.eq.s32.totalorder %s15, 3
      %p53 = por %p51, %p52
      %p54 = scmp.ne.s32.totalorder %s46, %s49
      %p55 = scmp.eq.s32.totalorder %s15, 0
      %p56 = por %p54, %p55
      %p57 = scmp.ne.s32.totalorder %s46, %s49
      %p58 = scmp.eq.s32.totalorder %s20, 3
      %p59 = por %p57, %p58
      %p60 = scmp.ne.s32.totalorder %s49, %s50
      %p61 = scmp.eq.s32.totalorder %s20, 0
      %p62 = por %p60, %p61
      %p63 = scmp.ne.s32.totalorder %s49, %s50
      %p64 = scmp.eq.s32.totalorder %s21, 3
      %p65 = por %p63, %p64
      %p67 = scmp.ne.s32.totalorder %s50, %s66
      %p68 = scmp.eq.s32.totalorder %s21, 0
      %p69 = por %p67, %p68
      %s71 = sadd.s32 %s70, 1
      %p74 = scmp.eq.s32.totalorder %s15, 3
      %p75 = scmp.ne.s32.totalorder %s70, %s72
      %p76 = scmp.eq.s32.totalorder %s15, 0
      %p77 = por %p75, %p76
      %p78 = scmp.ne.s32.totalorder %s70, %s72
      %p79 = scmp.eq.s32.totalorder %s20, 3
      %p80 = por %p78, %p79
      %p81 = scmp.ne.s32.totalorder %s72, %s73
      %p82 = scmp.eq.s32.totalorder %s20, 0
      %p83 = por %p81, %p82
      %p84 = scmp.ne.s32.totalorder %s72, %s73
      %p85 = scmp.eq.s32.totalorder %s21, 3
      %p86 = por %p84, %p85
      %p88 = scmp.ne.s32.totalorder %s73, %s87
      %p89 = scmp.eq.s32.totalorder %s21, 0
      %p90 = por %p88, %p89
      %s92 = sadd.s32 %s91, 1
      %p95 = scmp.eq.s32.totalorder %s15, 3
      %p96 = scmp.ne.s32.totalorder %s91, %s93
      %p97 = scmp.eq.s32.totalorder %s15, 0
      %p98 = por %p96, %p97
      %p99 = scmp.ne.s32.totalorder %s91, %s93
      %p100 = scmp.eq.s32.totalorder %s20, 3
      %p101 = por %p99, %p100
      %p102 = scmp.ne.s32.totalorder %s93, %s94
      %p103 = scmp.eq.s32.totalorder %s20, 0
      %p104 = por %p102, %p103
      %p105 = scmp.ne.s32.totalorder %s93, %s94
      %p106 = scmp.eq.s32.totalorder %s21, 3
      %p107 = por %p105, %p106
      %p109 = scmp.ne.s32.totalorder %s94, %s108
      %p110 = scmp.eq.s32.totalorder %s21, 0
      %p111 = por %p109, %p110
      %s112 = smul.u32 %s23, %s24
      %s113 = smul.u32 %s37, %s33
      %s114 = ssub.s32 %s22, %s41
      %s115 = ssub.s32 %s112, %s113
      %s116 = sor.u32 %s114, %s115
      %p117 = scmp.eq.s32.totalorder %s116, 0
      %s119 = sadd.s32 %s118, 1
      %s120 = scalar_select %p117, %s118, %s119
      %p123 = pneg %p117
      %p124 = scmp.eq.s32.totalorder %s15, 3
      %p125 = por %p123, %p124
      %p126 = scmp.ne.s32.totalorder %s118, %s121
      %p127 = scmp.eq.s32.totalorder %s15, 0
      %p128 = por %p126, %p127
      %p129 = scmp.ne.s32.totalorder %s118, %s121
      %p130 = scmp.eq.s32.totalorder %s20, 3
      %p131 = por %p129, %p130
      %p132 = scmp.ne.s32.totalorder %s121, %s122
      %p133 = scmp.eq.s32.totalorder %s20, 0
      %p134 = por %p132, %p133
      %p135 = scmp.ne.s32.totalorder %s121, %s122
      %p136 = scmp.eq.s32.totalorder %s21, 3
      %p137 = por %p135, %p136
      %p139 = scmp.ne.s32.totalorder %s122, %s138
      %p140 = scmp.eq.s32.totalorder %s21, 0
      %p141 = por %p139, %p140
      %p142 = scmp.le.s32.totalorder 1, %s15
      %p143 = scmp.lt.s32.totalorder %s15, 5
      %p144 = pnand %p142, %p143
      %p145 = pneg %p144
      // Predicated region
      $region9: #{tpu_custom_call.1} parent=5 // pred_check
        _
      $region10: #{tpu_custom_call.1} parent=5 // pred_check_branch
        %147 = sbr.rel (%p144) target = $region12
      $region11: #{tpu_custom_call.1} parent=5 // pred_region
        %s148 = ssub.s32 %s15, 1
        // Predicated region
        $region13: #{tpu_custom_call.1} parent=11 // pred_check
          %p149 = pneg %p83
        $region14: #{tpu_custom_call.1} parent=11 // pred_check_branch
          %151 = sbr.rel (%p149) target = $region16
        $region15: #{tpu_custom_call.1} parent=11 // pred_region
          _
        $region16: #{tpu_custom_call.1} parent=11 // pred_fallthru
          _
        // Predicated region
        $region17: #{tpu_custom_call.1} parent=11 // pred_check
          %p152 = pneg %p104
        $region18: #{tpu_custom_call.1} parent=11 // pred_check_branch
          %154 = sbr.rel (%p152) target = $region20
        $region19: #{tpu_custom_call.1} parent=11 // pred_region
          _
        $region20: #{tpu_custom_call.1} parent=11 // pred_fallthru
          _
      $region12: #{tpu_custom_call.1} parent=5 // pred_fallthru
        _
      %p155 = scmp.lt.s32.totalorder %s15, 4
      // Predicated region
      $region21: #{tpu_custom_call.1} parent=5 // pred_check
        %p156 = pneg %p155
      $region22: #{tpu_custom_call.1} parent=5 // pred_check_branch
        %158 = sbr.rel (%p156) target = $region24
      $region23: #{tpu_custom_call.1} parent=5 // pred_region
        // Predicated region
        $region25: #{tpu_custom_call.1} parent=23 // pred_check
          %p159 = pneg %p56
        $region26: #{tpu_custom_call.1} parent=23 // pred_check_branch
          %161 = sbr.rel (%p159) target = $region28
        $region27: #{tpu_custom_call.1} parent=23 // pred_region
          %s162 = sand.u32 %s46, 1
          %s163 = scalar_lea.sflag [#allocation7], %s162
          %s164 = sand.u32 %s46, 1
          %s165 = smul.addr %s164, 64
          %s166 = scalar_lea.vmem [#allocation6], %s165
          %s167 = smul.u32 8, %s24
          %169 = vsyncadd %s163, 0
          %s170 = smul.addr %s22, 8
          %s171 = sadd.s32 %s167, %s170
          %s172 = smul.addr %s171, 8
          %s173 = scalar_lea.hbm %s0, %s172
          %s175 = sshll.u32 %s173, 4
          %s176 = int_to_ptr.hbm [resolvable:$true] %s175
          %s177 = sshll.u32 %s166, 4
          %s178 = int_to_ptr.vmem [resolvable:$true] %s177
          %180 = dma.hbm_to_vmem [thread:$0]  %s176, 1024, %s178, %s163
        $region28: #{tpu_custom_call.1} parent=23 // pred_fallthru
          _
      $region24: #{tpu_custom_call.1} parent=5 // pred_fallthru
        _
      %p181 = scmp.le.s32.totalorder 1, %s15
      %p182 = scmp.lt.s32.totalorder %s15, 5
      %p183 = pnand %p181, %p182
      %p184 = pneg %p183
      // Predicated region
      $region29: #{tpu_custom_call.1} parent=5 // pred_check
        _
      $region30: #{tpu_custom_call.1} parent=5 // pred_check_branch
        %186 = sbr.rel (%p183) target = $region32
      $region31: #{tpu_custom_call.1} parent=5 // pred_region
        %s187 = ssub.s32 %s15, 1
        %s188 = sand.u32 %s49, 1
        %s189 = scalar_lea.sflag [#allocation7], %s188
        %s190 = sand.u32 %s49, 1
        %s191 = smul.addr %s190, 64
        %s192 = scalar_lea.vmem [#allocation6], %s191
        // Predicated region
        $region33: #{tpu_custom_call.1} parent=31 // pred_check
          %p193 = pneg %p62
        $region34: #{tpu_custom_call.1} parent=31 // pred_check_branch
          %195 = sbr.rel (%p193) target = $region36
        $region35: #{tpu_custom_call.1} parent=31 // pred_region
          %197 = dma.done %s189, 1024
        $region36: #{tpu_custom_call.1} parent=31 // pred_fallthru
          _
        %s198 = sand.u32 %s49, 1
        %s199 = scalar_lea.sflag [#allocation7], %s198
        %s200 = sand.u32 %s49, 1
        %s201 = smul.addr %s200, 64
        %s202 = scalar_lea.vmem [#allocation6], %s201
        %p203 = pneg %p62
        %p204 = pneg %p59
        %p205 = pneg %p83
        %p206 = pneg %p80
        %p207 = pneg %p104
        %p208 = pneg %p101
        %p209 = pneg %p134
        %p210 = pneg %p131
        %s211 = sand.u32 %s121, 1
        %s212 = scalar_lea.sflag [#allocation8], %s211
        %s213 = sand.u32 %s121, 1
        %s214 = smul.addr %s213, 64
        %s215 = scalar_lea.vmem [#allocation9], %s214
        %s216 = smul.u32 8, %s27
        %s217 = smul.u32 %s26, %s27
        %s218 = smul.u32 8, %s217
        %p219 = scmp.eq.s32.totalorder %s26, 0
        %p220 = scmp.eq.s32.totalorder %s27, 0
        %p221 = pnand %p219, %p220
        %p222 = pneg %p221
        // Predicated region
        $region37: #{tpu_custom_call.1} parent=31 // pred_check
          _
        $region38: #{tpu_custom_call.1} parent=31 // pred_check_branch
          %224 = sbr.rel (%p221) target = $region40
        $region39: #{tpu_custom_call.1} parent=31 // pred_region
          %vm225 = vcmask 7168
          %226 = vst.msk [vmem:[#allocation2] sm:$0xff] %vm225, 0.0
          %227 = vst.msk [vmem:[#allocation3] sm:$0xff] %vm225, 0.0
        $region40: #{tpu_custom_call.1} parent=31 // pred_fallthru
          _
        // Predicated region
        $region41: #{tpu_custom_call.1} parent=31 // pred_check
          %p228 = pneg %p219
        $region42: #{tpu_custom_call.1} parent=31 // pred_check_branch
          %230 = sbr.rel (%p228) target = $region44
        $region43: #{tpu_custom_call.1} parent=31 // pred_region
          %v231 = vld [vmem:[%s192] sm:$0xff]
          %v232 = vld [vmem:[%s192 + $0x8] sm:$0xff]
          %v233 = vld [vmem:[%s192 + $0x10] sm:$0xff]
          %v234 = vld [vmem:[%s192 + $0x18] sm:$0xff]
          %v235 = vld [vmem:[%s192 + $0x20] sm:$0xff]
          %v236 = vld [vmem:[%s192 + $0x28] sm:$0xff]
          %v237 = vld [vmem:[%s192 + $0x30] sm:$0xff]
          %v238 = vld [vmem:[%s192 + $0x38] sm:$0xff]
          %v239 = vld [vmem:[#allocation2] sm:$0xff]
          %v240 = vadd.f32 %v231, %v232
          %v241 = vadd.f32 %v240, %v233
          %v242 = vadd.f32 %v241, %v234
          %v243 = vadd.f32 %v242, %v235
          %v244 = vadd.f32 %v243, %v236
          %v245 = vadd.f32 %v244, %v237
          %v246 = vadd.f32 %v245, %v238
          %247 = vadd.xlane.f32.xlu0 %v246
          %v248 = vpop.xlane.xlu0 %247
          %v249 = vadd.f32 %v239, %v248
          %vm250 = vcmask 7168
          %251 = vst.msk [vmem:[#allocation2] sm:$0xff] %vm250, %v249
          %v252 = vld [vmem:[#allocation3] sm:$0xff]
          %v253 = vmul.f32 %v231, %v231
          %v254 = vmul.f32 %v232, %v232
          %v255 = vmul.f32 %v233, %v233
          %v256 = vmul.f32 %v234, %v234
          %v257 = vmul.f32 %v235, %v235
          %v258 = vmul.f32 %v236, %v236
          %v259 = vmul.f32 %v237, %v237
          %v260 = vmul.f32 %v238, %v238
          %v261 = vadd.f32 %v253, %v254
          %v262 = vadd.f32 %v261, %v255
          %v263 = vadd.f32 %v262, %v256
          %v264 = vadd.f32 %v263, %v257
          %v265 = vadd.f32 %v264, %v258
          %v266 = vadd.f32 %v265, %v259
          %v267 = vadd.f32 %v266, %v260
          %268 = vadd.xlane.f32.xlu0 %v267
          %v269 = vpop.xlane.xlu0 %268
          %v270 = vadd.f32 %v252, %v269
          %271 = vst.msk [vmem:[#allocation3] sm:$0xff] %vm250, %v270
        $region44: #{tpu_custom_call.1} parent=31 // pred_fallthru
          _
        %p272 = scmp.eq.s32.totalorder %s26, 1
        // Predicated region
        $region45: #{tpu_custom_call.1} parent=31 // pred_check
          %p273 = pneg %p272
        $region46: #{tpu_custom_call.1} parent=31 // pred_check_branch
          %275 = sbr.rel (%p273) target = $region48
        $region47: #{tpu_custom_call.1} parent=31 // pred_region
          // Predicated region
          $region49: #{tpu_custom_call.1} parent=47 // pred_check
            %p276 = pneg %p220
          $region50: #{tpu_custom_call.1} parent=47 // pred_check_branch
            %278 = sbr.rel (%p276) target = $region52
          $region51: #{tpu_custom_call.1} parent=47 // pred_region
            %v279 = vld [vmem:[#allocation2] sm:$0xff]
            %vm280 = vcmask 7168
            %v281 = vsel %vm280, %v279, 0.0
            %282 = vadd.xlane.f32.xlu0 %v281
            %v283 = vpop.xlane.xlu0 %282
            %v284 = vrot.slane %v283, 4
            %v285 = vadd.f32 %v283, %v284
            %v286 = vrot.slane %v285, 2
            %v287 = vadd.f32 %v285, %v286
            %v288 = vrot.slane %v287, 1
            %v289 = vadd.f32 %v287, %v288
            %s290 = vtos %v289
            %v291 = vld [vmem:[#allocation3] sm:$0xff]
            %v292 = vsel %vm280, %v291, 0.0
            %293 = vadd.xlane.f32.xlu0 %v292
            %v294 = vpop.xlane.xlu0 %293
            %v295 = vrot.slane %v294, 4
            %v296 = vadd.f32 %v294, %v295
            %v297 = vrot.slane %v296, 2
            %v298 = vadd.f32 %v296, %v297
            %v299 = vrot.slane %v298, 1
            %v300 = vadd.f32 %v298, %v299
            %s301 = vtos %v300
            %s302 = smul.f32 %s290, 0.00012207031
            %s303 = smul.f32 %s301, 0.00012207031
            %s304 = smul.f32 %s302, %s302
            %s305 = ssub.f32 %s303, %s304
            %s306 = smax.f32 %s305, 0.0
            %s307 = sadd.f32 %s306, 1e-05
            %v308 = vstv %s307
            %v309 = vrsqrt.pop %v308
            %v310 = vmul.f32 %v309, %v308
            %v311 = vmul.f32 %v310, %v309
            %v312 = vmul.f32 0.5, %v311
            %v313 = vsub.f32 1.5, %v312
            %v314 = vmul.f32 %v309, %v313
            %vm315 = vweird.f32 %v308
            %vm316 = vweird.f32 %v309
            %vm317 = vmor %vm315, %vm316
            %v318 = vsel %vm317, %v309, %v314
            %s319 = vtos %v318
            %v320 = vld [vmem:[%s1] sm:$0xff]
            %v321 = vld [vmem:[%s2] sm:$0xff]
            %v322 = vstv %s319
            %v323 = vmul.f32 %v320, %v322
            %324 = vst.msk [vmem:[#allocation4] sm:$0xff] %vm280, %v323
            %v325 = vstv %s302
            %v326 = vmul.f32 %v325, %v323
            %v327 = vsub.f32 %v321, %v326
            %328 = vst.msk [vmem:[#allocation5] sm:$0xff] %vm280, %v327
          $region52: #{tpu_custom_call.1} parent=47 // pred_fallthru
            _
          %v329 = vld [vmem:[%s192] sm:$0xff]
          %v330 = vld [vmem:[%s192 + $0x8] sm:$0xff]
          %v331 = vld [vmem:[%s192 + $0x10] sm:$0xff]
          %v332 = vld [vmem:[%s192 + $0x18] sm:$0xff]
          %v333 = vld [vmem:[%s192 + $0x20] sm:$0xff]
          %v334 = vld [vmem:[%s192 + $0x28] sm:$0xff]
          %v335 = vld [vmem:[%s192 + $0x30] sm:$0xff]
          %v336 = vld [vmem:[%s192 + $0x38] sm:$0xff]
          %v337 = vld [vmem:[#allocation4] sm:$0xff]
          %339 = vset.pattern.permute.xlu0 0
          %340 = vperm.xlu0 %339, %v337
          %v341 = vpop.permute.xlu0 %340
          %v343 = vmul.f32 %v329, %v341
          %v344 = vmul.f32 %v330, %v341
          %v345 = vmul.f32 %v331, %v341
          %v346 = vmul.f32 %v332, %v341
          %v347 = vmul.f32 %v333, %v341
          %v348 = vmul.f32 %v334, %v341
          %v349 = vmul.f32 %v335, %v341
          %v350 = vmul.f32 %v336, %v341
          %v351 = vld [vmem:[#allocation5] sm:$0xff]
          %353 = vset.pattern.permute.xlu0 0
          %354 = vperm.xlu0 %353, %v351
          %v355 = vpop.permute.xlu0 %354
          %v357 = vadd.f32 %v343, %v355
          %v358 = vadd.f32 %v344, %v355
          %v359 = vadd.f32 %v345, %v355
          %v360 = vadd.f32 %v346, %v355
          %v361 = vadd.f32 %v347, %v355
          %v362 = vadd.f32 %v348, %v355
          %v363 = vadd.f32 %v349, %v355
          %v364 = vadd.f32 %v350, %v355
          %v365 = vmax.f32 %v357, 0.0
          %v366 = vmax.f32 %v358, 0.0
          %v367 = vmax.f32 %v359, 0.0
          %v368 = vmax.f32 %v360, 0.0
          %v369 = vmax.f32 %v361, 0.0
          %v370 = vmax.f32 %v362, 0.0
          %v371 = vmax.f32 %v363, 0.0
          %v372 = vmax.f32 %v364, 0.0
          %373 = vst [vmem:[%s215] sm:$0xff] %v365
          %374 = vst [vmem:[%s215 + $0x8] sm:$0xff] %v366
          %375 = vst [vmem:[%s215 + $0x10] sm:$0xff] %v367
          %376 = vst [vmem:[%s215 + $0x18] sm:$0xff] %v368
          %377 = vst [vmem:[%s215 + $0x20] sm:$0xff] %v369
          %378 = vst [vmem:[%s215 + $0x28] sm:$0xff] %v370
          %379 = vst [vmem:[%s215 + $0x30] sm:$0xff] %v371
          %380 = vst [vmem:[%s215 + $0x38] sm:$0xff] %v372
        $region48: #{tpu_custom_call.1} parent=31 // pred_fallthru
          _
        %s381 = sand.u32 %s121, 1
        %s382 = scalar_lea.sflag [#allocation8], %s381
        %s383 = sand.u32 %s121, 1
        %s384 = smul.addr %s383, 64
        %s385 = scalar_lea.vmem [#allocation9], %s384
        // Predicated region
        $region53: #{tpu_custom_call.1} parent=31 // pred_check
          %p386 = pneg %p131
        $region54: #{tpu_custom_call.1} parent=31 // pred_check_branch
          %388 = sbr.rel (%p386) target = $region56
        $region55: #{tpu_custom_call.1} parent=31 // pred_region
          %s389 = smul.u32 %s26, %s27
          %s390 = smul.u32 8, %s389
          %392 = vsyncadd %s382, 0
          %s393 = smul.addr %s25, 8
          %s394 = sadd.s32 %s390, %s393
          %s395 = smul.addr %s394, 8
          %s396 = scalar_lea.hbm %s3, %s395
          %s398 = sshll.u32 %s385, 4
          %s399 = int_to_ptr.vmem [resolvable:$true] %s398
          %s400 = sshll.u32 %s396, 4
          %s401 = int_to_ptr.hbm [resolvable:$true] %s400
          %403 = dma.vmem_to_hbm [thread:$0]  %s399, 1024, %s401, %s382
        $region56: #{tpu_custom_call.1} parent=31 // pred_fallthru
          _
      $region32: #{tpu_custom_call.1} parent=5 // pred_fallthru
        _
      %p404 = scmp.le.s32.totalorder 2, %s15
      // Predicated region
      $region57: #{tpu_custom_call.1} parent=5 // pred_check
        %p405 = pneg %p404
      $region58: #{tpu_custom_call.1} parent=5 // pred_check_branch
        %407 = sbr.rel (%p405) target = $region60
      $region59: #{tpu_custom_call.1} parent=5 // pred_region
        %s408 = ssub.s32 %s15, 2
        // Predicated region
        $region61: #{tpu_custom_call.1} parent=59 // pred_check
          %p409 = pneg %p137
        $region62: #{tpu_custom_call.1} parent=59 // pred_check_branch
          %411 = sbr.rel (%p409) target = $region64
        $region63: #{tpu_custom_call.1} parent=59 // pred_region
          %s412 = sand.u32 %s122, 1
          %s413 = scalar_lea.sflag [#allocation8], %s412
          %s414 = sand.u32 %s122, 1
          %s415 = smul.addr %s414, 64
          %s416 = scalar_lea.vmem [#allocation9], %s415
          %418 = dma.done %s413, 1024
        $region64: #{tpu_custom_call.1} parent=59 // pred_fallthru
          _
      $region60: #{tpu_custom_call.1} parent=5 // pred_fallthru
        _
    $region6: #{tpu_custom_call.1} parent=1 // loop_footer
      %s19 = sadd.s32 1, %s15
    $region7: #{tpu_custom_call.1} parent=1 // loop_footer_branch
      %14 = sbr.rel target = $region3
    $region8: #{tpu_custom_call.1} parent=1 // loop_exit
      _
    %419 = vsyncpa [#allocation7], 1
    %s420 = scalar_lea.sflag [#allocation7], 1
    %421 = vsyncpa %s420, 1
    %422 = vsyncpa [#allocation8], 1
    %s423 = scalar_lea.sflag [#allocation8], 1
    %424 = vsyncpa %s423, 1

</llo_original>
